<compile_context>
chip_gen: v5e
topology: v5e:2x2
jax: 0.10.0
libtpu: 0.0.40
codegen_flags: <defaults>
</compile_context>

<pallas_src>
import functools

import numpy as np
import jax
import jax.numpy as jnp
from jax import lax
from jax.experimental import pallas as pl
from jax.experimental.pallas import tpu as pltpu

# ----------------------------------------------------------------------------
# Model hyper-parameters (small, deterministic, synthetic)
# ----------------------------------------------------------------------------
VOCAB_SIZE = 64
EMBED_DIM = 32
NUM_LAYERS = 2
GRID_SIZE = 32
MAX_SEQ_LEN = 64
NUM_STEPS = 4          # diffusion steps inside UnifiedFieldDynamics
RBF_SIGMA = 0.2        # FieldProjector RBF width (fixed, synthetic)
DIFF_DT = 0.05         # diffusion step size (fixed, synthetic)
LN_EPS = 1e-5

SLAB_W = 128           # lane-dense width of the packed param slab / padded head
HEAD_PAD = 128         # padded vocab width (>= VOCAB_SIZE, multiple of 128)

BATCH = 2
SEQ_LEN = 8

assert 4 * EMBED_DIM <= SLAB_W and 2 * EMBED_DIM <= SLAB_W
assert VOCAB_SIZE <= HEAD_PAD and HEAD_PAD == SLAB_W


# ----------------------------------------------------------------------------
# In-kernel helpers
# ----------------------------------------------------------------------------
def _layer_norm(x, gamma, beta, eps=LN_EPS):
    mu = jnp.mean(x, axis=-1, keepdims=True)
    var = jnp.mean((x - mu) * (x - mu), axis=-1, keepdims=True)
    return (x - mu) * lax.rsqrt(var + eps) * gamma + beta


# ----------------------------------------------------------------------------
# Single fused kernel: embedding gather + all TFN layers + final LN + head.
# ----------------------------------------------------------------------------
def _fused_tfn_kernel(ids_ref, tok_ref, a_ref, c_ref, wo_ref, vec_ref, wv_ref,
                      out_ref, *, num_layers, batch, seq, embed_dim, vocab):
    BN = batch * seq
    D = embed_dim
    L = num_layers

    # --- token-embedding gather, fused as a one-hot MXU matmul (tiny vocab) ---
    ids = ids_ref[...]                                              # (BN, 1) int32
    iota = lax.broadcasted_iota(jnp.int32, (BN, vocab), 1)
    onehot = (iota == ids).astype(jnp.float32)                      # (BN, V)
    x = jnp.dot(onehot, tok_ref[...],
                preferred_element_type=jnp.float32)                 # (BN, D)

    a = a_ref[...]                                                  # (N, N) = A + I
    vec = vec_ref[...]                                              # (2L+2, 128) slab

    for l in range(L):
        # packed per-layer gains/biases (static lane slices of the slab)
        g1 = vec[l:l + 1, 0:D]
        b1 = vec[l:l + 1, D:2 * D]
        g2 = vec[l:l + 1, 2 * D:3 * D]
        b2 = vec[l:l + 1, 3 * D:4 * D]
        bo = vec[L + l:L + l + 1, 0:D]

        # FieldProjector -> diffusion -> FieldSampler + residual, all folded
        # into the constant (A+I), applied per batch block (block-diagonal).
        field = jnp.concatenate(
            [jnp.dot(a, x[b * seq:(b + 1) * seq, :],
                     preferred_element_type=jnp.float32)
             for b in range(batch)], axis=0)                        # (BN, D)

        # + (A+I) @ positional-add (precomputed constant), then LayerNorm1
        enh = _layer_norm(field + c_ref[l], g1, b1)

        # output_proj + residual + LayerNorm2 (dropout = identity at inference)
        y = jnp.dot(enh, wo_ref[l], preferred_element_type=jnp.float32) + bo
        x = _layer_norm(y + enh, g2, b2)

    # LM head: final LayerNorm + vocab projection (lane-dense, padded to 128)
    fg = vec[2 * L:2 * L + 1, 0:D]
    fb = vec[2 * L:2 * L + 1, D:2 * D]
    bv = vec[2 * L + 1:2 * L + 2, :]                                # (1, 128)
    xn = _layer_norm(x, fg, fb)
    out_ref[...] = (jnp.dot(xn, wv_ref[...],
                            preferred_element_type=jnp.float32) + bv)  # (BN, 128)


# ----------------------------------------------------------------------------
# Constant field-pipeline operator (numpy, built once):
#   sampled + emb = (W @ M^k @ K^T + I) @ emb  =  A_plus_I @ emb
# TODO(synk): interference_type='standard' term of UnifiedFieldDynamics and
#             RBF normalization are not specified in the reference; only the
#             diffusion evolution path is modeled (dropout is identity).
# ----------------------------------------------------------------------------
def _normalized_positions(seq_len):
    denom = max(seq_len - 1, 1)
    return np.arange(seq_len, dtype=np.float32) / float(denom)


def _build_field_operator(seq_len, grid_size, sigma, dt, num_steps):
    N, G = seq_len, grid_size
    pos = _normalized_positions(N)                                   # (N,)
    grid = np.linspace(0.0, 1.0, G, dtype=np.float32)                # (G,)

    # RBF kernel K[n, g]
    diff = pos[:, None] - grid[None, :]
    K = np.exp(-(diff * diff) / (2.0 * sigma * sigma)).astype(np.float32)

    # Diffusion step matrix M = I + dt * Laplacian (replicate/Neumann boundary)
    eye = np.eye(G, dtype=np.float32)
    up = np.concatenate([eye[:1], eye[:-1]], axis=0)
    dn = np.concatenate([eye[1:], eye[-1:]], axis=0)
    M = eye + np.float32(dt) * (up + dn - 2.0 * eye)
    Mk = np.linalg.matrix_power(M, num_steps).astype(np.float32)

    # Linear-interp sampling weights W[n, g]
    x = np.clip(pos, 0.0, 1.0) * float(G - 1)
    i0 = np.minimum(np.floor(x), float(G - 2))
    frac = x - i0
    i0i = i0.astype(np.int32)
    cols = np.arange(G, dtype=np.int32)[None, :]
    W = (np.where(cols == i0i[:, None], 1.0 - frac[:, None], 0.0)
         + np.where(cols == i0i[:, None] + 1, frac[:, None], 0.0)).astype(np.float32)

    A = (W @ Mk @ K.T).astype(np.float32)                            # (N, N)
    A_plus_I = (A + np.eye(N, dtype=np.float32)).astype(np.float32)  # residual folded
    return A_plus_I, pos


# ----------------------------------------------------------------------------
# Parameters (deterministic, synthetic) and one-time packing into kernel operands
# ----------------------------------------------------------------------------
def init_params(key):
    keys = jax.random.split(key, 4 + NUM_LAYERS)
    p = {
        "token_emb": 0.02 * jax.random.normal(keys[0], (VOCAB_SIZE, EMBED_DIM), jnp.float32),
        "pos_emb": 0.02 * jax.random.normal(keys[1], (MAX_SEQ_LEN, EMBED_DIM), jnp.float32),
        "out_w_t": (0.02 * jax.random.normal(keys[2], (VOCAB_SIZE, EMBED_DIM), jnp.float32)).T,
        "out_b": jnp.zeros((1, VOCAB_SIZE), jnp.float32),
        "final_g": jnp.ones((1, EMBED_DIM), jnp.float32),
        "final_b": jnp.zeros((1, EMBED_DIM), jnp.float32),
        "layers": [],
    }
    for i in range(NUM_LAYERS):
        k0, k1 = jax.random.split(keys[3 + i], 2)
        p["layers"].append({
            "wo_t": (0.02 * jax.random.normal(k0, (EMBED_DIM, EMBED_DIM), jnp.float32)).T,
            "bo": jnp.zeros((1, EMBED_DIM), jnp.float32),
            "ln1_g": jnp.ones((1, EMBED_DIM), jnp.float32),
            "ln1_b": jnp.zeros((1, EMBED_DIM), jnp.float32),
            "ln2_g": jnp.ones((1, EMBED_DIM), jnp.float32),
            "ln2_b": jnp.zeros((1, EMBED_DIM), jnp.float32),
            # learned positional-embedding strategy table of the layer
            "pos_table": 0.02 * jax.random.normal(k1, (MAX_SEQ_LEN, EMBED_DIM), jnp.float32),
        })
    return p


def pack_params(params, batch, seq_len):
    """One-time (outside jit) packing of all constants into the kernel operands."""
    B, N, D, L, V = batch, seq_len, EMBED_DIM, NUM_LAYERS, VOCAB_SIZE

    A_plus_I_np, pos_np = _build_field_operator(N, GRID_SIZE, RBF_SIGMA, DIFF_DT, NUM_STEPS)
    a = jnp.asarray(A_plus_I_np)                                     # (N, N)

    # TODO(synk): 'learned' positional embedding strategy of EnhancedTFNLayer is
    # not specified in the reference; approximated as nearest-index lookup into
    # a learned table of size max_seq_len (identical across batch).
    idx_np = np.clip(np.round(pos_np * (MAX_SEQ_LEN - 1)).astype(np.int32),
                     0, MAX_SEQ_LEN - 1)                             # (N,), static

    # Per-layer positional adds (model-level pos_emb folded into layer 0),
    # pre-multiplied by (A+I) so the kernel does NO positional work at all.
    c_rows = []
    for l, layer in enumerate(params["layers"]):
        p_l = layer["pos_table"][idx_np]                             # (N, D)
        if l == 0:
            p_l = p_l + params["pos_emb"][:N]
        c_l = jnp.dot(a, p_l)                                        # (N, D)
        c_rows.append(jnp.tile(c_l, (B, 1)))                         # (B*N, D)
    c = jnp.stack(c_rows)                                            # (L, B*N, D)

    wo = jnp.stack([layer["wo_t"] for layer in params["layers"]])    # (L, D, D)

    # Packed lane-dense parameter slab (2L+2, 128):
    #   rows 0..L-1   : [ln1_g | ln1_b | ln2_g | ln2_b]
    #   rows L..2L-1  : [bo | 0...]
    #   row  2L       : [final_g | final_b | 0...]
    #   row  2L+1     : out_b padded to 128
    def _pad_row(r):
        return jnp.pad(r, ((0, 0), (0, SLAB_W - r.shape[1])))
    rows = []
    for layer in params["layers"]:
        rows.append(_pad_row(jnp.concatenate(
            [layer["ln1_g"], layer["ln1_b"], layer["ln2_g"], layer["ln2_b"]], axis=-1)))
    for layer in params["layers"]:
        rows.append(_pad_row(layer["bo"]))
    rows.append(_pad_row(jnp.concatenate([params["final_g"], params["final_b"]], axis=-1)))
    rows.append(_pad_row(params["out_b"]))
    vec = jnp.concatenate(rows, axis=0)                              # (2L+2, 128)

    wv = jnp.pad(params["out_w_t"], ((0, 0), (0, HEAD_PAD - V)))     # (D, 128) lane-dense

    return {"token_emb": params["token_emb"], "a": a, "c": c,
            "wo": wo, "vec": vec, "wv": wv}


# ----------------------------------------------------------------------------
# Forward: reshape ids -> one fused pallas_call -> slice/reshape logits
# ----------------------------------------------------------------------------
def enhanced_tfn_forward(packed, input_ids):
    """input_ids: [B, N] int32 -> logits: [B, N, VOCAB_SIZE] float32."""
    B, N = input_ids.shape
    L = packed["c"].shape[0]
    BN = B * N

    ids_flat = input_ids.reshape(BN, 1).astype(jnp.int32)

    kernel = functools.partial(
        _fused_tfn_kernel, num_layers=L, batch=B, seq=N,
        embed_dim=EMBED_DIM, vocab=VOCAB_SIZE)

    vmem = pl.BlockSpec(memory_space=pltpu.MemorySpace.VMEM)
    logits_pad = pl.pallas_call(
        kernel,
        out_shape=jax.ShapeDtypeStruct((BN, HEAD_PAD), jnp.float32),
        in_specs=[vmem] * 7,
        out_specs=vmem,
        # No grid: whole problem (<60 KiB of VMEM) in one invocation — no
        # per-step pipeline overhead, no intermediate HBM traffic.
    )(ids_flat, packed["token_emb"], packed["a"], packed["c"],
      packed["wo"], packed["vec"], packed["wv"])                     # (BN, 128)

    return logits_pad[:, :VOCAB_SIZE].reshape(B, N, VOCAB_SIZE)


if __name__ == "__main__":
    key = jax.random.PRNGKey(0)
    params = init_params(key)
    packed = pack_params(params, BATCH, SEQ_LEN)        # one-time, outside jit

    input_ids = jax.random.randint(jax.random.PRNGKey(1), (BATCH, SEQ_LEN),
                                   0, VOCAB_SIZE, dtype=jnp.int32)

    forward = jax.jit(enhanced_tfn_forward)
    logits = forward(packed, input_ids)
    jax.block_until_ready(logits)

    assert logits.shape == (BATCH, SEQ_LEN, VOCAB_SIZE)
    assert bool(jnp.all(jnp.isfinite(logits)))
    print("KERNEL_OK")
</pallas_src>

<mosaic_0001>
module attributes {stable_mosaic.version = 11 : i64} {
  func.func @_fused_tfn_kernel(%arg0: memref<16x1xi32, #tpu.memory_space<vmem>>, %arg1: memref<64x32xf32, #tpu.memory_space<vmem>>, %arg2: memref<8x8xf32, #tpu.memory_space<vmem>>, %arg3: memref<2x16x32xf32, #tpu.memory_space<vmem>>, %arg4: memref<2x32x32xf32, #tpu.memory_space<vmem>>, %arg5: memref<6x128xf32, #tpu.memory_space<vmem>>, %arg6: memref<32x128xf32, #tpu.memory_space<vmem>>, %arg7: memref<16x128xf32, #tpu.memory_space<vmem>>) attributes {dimension_semantics = [], scalar_prefetch = 0 : i64, scratch_operands = 0 : i64, tpu.core_type = #tpu.core_type<tc>} {
    %c0 = arith.constant 0 : index
    %c0_0 = arith.constant 0 : index
    %0 = vector.load %arg0[%c0, %c0_0] : memref<16x1xi32, #tpu.memory_space<vmem>>, vector<16x1xi32>
    %1 = tpu.iota {dimensions = array<i32: 1>} : vector<16x64xi32>
    %2 = vector.broadcast %0 : vector<16x1xi32> to vector<16x64xi32>
    %3 = arith.cmpi eq, %1, %2 : vector<16x64xi32>
    %4 = arith.extui %3 : vector<16x64xi1> to vector<16x64xi32>
    %5 = arith.sitofp %4 : vector<16x64xi32> to vector<16x64xf32>
    %c0_1 = arith.constant 0 : index
    %c0_2 = arith.constant 0 : index
    %6 = vector.load %arg1[%c0_1, %c0_2] : memref<64x32xf32, #tpu.memory_space<vmem>>, vector<64x32xf32>
    %cst = arith.constant dense<0.000000e+00> : vector<16x32xf32>
    %7 = tpu.matmul %5, %6, %cst {dimension_numbers = #tpu.dot_dimension_numbers<[1], [0], [0], [1], [0, 0, 1, 1], [], []>} : vector<16x64xf32>, vector<64x32xf32>, vector<16x32xf32> -> vector<16x32xf32>
    %c0_3 = arith.constant 0 : index
    %c0_4 = arith.constant 0 : index
    %8 = vector.load %arg2[%c0_3, %c0_4] : memref<8x8xf32, #tpu.memory_space<vmem>>, vector<8x8xf32>
    %c0_5 = arith.constant 0 : index
    %c0_6 = arith.constant 0 : index
    %9 = vector.load %arg5[%c0_5, %c0_6] : memref<6x128xf32, #tpu.memory_space<vmem>>, vector<6x128xf32>
    %10 = vector.extract_strided_slice %9 {offsets = [0, 0], sizes = [1, 32], strides = [1, 1]} : vector<6x128xf32> to vector<1x32xf32>
    %11 = vector.extract_strided_slice %9 {offsets = [0, 32], sizes = [1, 32], strides = [1, 1]} : vector<6x128xf32> to vector<1x32xf32>
    %12 = vector.extract_strided_slice %9 {offsets = [0, 64], sizes = [1, 32], strides = [1, 1]} : vector<6x128xf32> to vector<1x32xf32>
    %13 = vector.extract_strided_slice %9 {offsets = [0, 96], sizes = [1, 32], strides = [1, 1]} : vector<6x128xf32> to vector<1x32xf32>
    %14 = vector.extract_strided_slice %9 {offsets = [2, 0], sizes = [1, 32], strides = [1, 1]} : vector<6x128xf32> to vector<1x32xf32>
    %15 = vector.extract_strided_slice %7 {offsets = [0, 0], sizes = [8, 32], strides = [1, 1]} : vector<16x32xf32> to vector<8x32xf32>
    %cst_7 = arith.constant dense<0.000000e+00> : vector<8x32xf32>
    %16 = tpu.matmul %8, %15, %cst_7 {dimension_numbers = #tpu.dot_dimension_numbers<[1], [0], [0], [1], [0, 0, 1, 1], [], []>} : vector<8x8xf32>, vector<8x32xf32>, vector<8x32xf32> -> vector<8x32xf32>
    %17 = vector.extract_strided_slice %7 {offsets = [8, 0], sizes = [8, 32], strides = [1, 1]} : vector<16x32xf32> to vector<8x32xf32>
    %cst_8 = arith.constant dense<0.000000e+00> : vector<8x32xf32>
    %18 = tpu.matmul %8, %17, %cst_8 {dimension_numbers = #tpu.dot_dimension_numbers<[1], [0], [0], [1], [0, 0, 1, 1], [], []>} : vector<8x8xf32>, vector<8x32xf32>, vector<8x32xf32> -> vector<8x32xf32>
    %19 = tpu.concatenate %16, %18 in 0 : vector<8x32xf32>, vector<8x32xf32> -> vector<16x32xf32>
    %c0_9 = arith.constant 0 : index
    %c0_10 = arith.constant 0 : index
    %c0_11 = arith.constant 0 : index
    %20 = vector.load %arg3[%c0_9, %c0_10, %c0_11] : memref<2x16x32xf32, #tpu.memory_space<vmem>>, vector<1x16x32xf32>
    %21 = vector.shape_cast %20 : vector<1x16x32xf32> to vector<16x32xf32>
    %22 = arith.addf %19, %21 : vector<16x32xf32>
    %cst_12 = arith.constant dense<0.000000e+00> : vector<16xf32>
    %23 = vector.multi_reduction <add>, %22, %cst_12 [1] : vector<16x32xf32> to vector<16xf32>
    %24 = vector.shape_cast %23 : vector<16xf32> to vector<16x1xf32>
    %cst_13 = arith.constant 3.200000e+01 : f32
    %25 = vector.broadcast %cst_13 : f32 to vector<16x1xf32>
    %26 = arith.divf %24, %25 : vector<16x1xf32>
    %27 = vector.broadcast %26 : vector<16x1xf32> to vector<16x32xf32>
    %28 = arith.subf %22, %27 : vector<16x32xf32>
    %29 = vector.broadcast %26 : vector<16x1xf32> to vector<16x32xf32>
    %30 = arith.subf %22, %29 : vector<16x32xf32>
    %31 = arith.mulf %28, %30 : vector<16x32xf32>
    %cst_14 = arith.constant dense<0.000000e+00> : vector<16xf32>
    %32 = vector.multi_reduction <add>, %31, %cst_14 [1] : vector<16x32xf32> to vector<16xf32>
    %33 = vector.shape_cast %32 : vector<16xf32> to vector<16x1xf32>
    %cst_15 = arith.constant 3.200000e+01 : f32
    %34 = vector.broadcast %cst_15 : f32 to vector<16x1xf32>
    %35 = arith.divf %33, %34 : vector<16x1xf32>
    %36 = vector.broadcast %26 : vector<16x1xf32> to vector<16x32xf32>
    %37 = arith.subf %22, %36 : vector<16x32xf32>
    %cst_16 = arith.constant 9.99999974E-6 : f32
    %38 = vector.broadcast %cst_16 : f32 to vector<16x1xf32>
    %39 = arith.addf %35, %38 : vector<16x1xf32>
    %40 = math.rsqrt %39 : vector<16x1xf32>
    %41 = vector.broadcast %40 : vector<16x1xf32> to vector<16x32xf32>
    %42 = arith.mulf %37, %41 : vector<16x32xf32>
    %43 = vector.broadcast %10 : vector<1x32xf32> to vector<16x32xf32>
    %44 = arith.mulf %42, %43 : vector<16x32xf32>
    %45 = vector.broadcast %11 : vector<1x32xf32> to vector<16x32xf32>
    %46 = arith.addf %44, %45 : vector<16x32xf32>
    %c0_17 = arith.constant 0 : index
    %c0_18 = arith.constant 0 : index
    %c0_19 = arith.constant 0 : index
    %47 = vector.load %arg4[%c0_17, %c0_18, %c0_19] : memref<2x32x32xf32, #tpu.memory_space<vmem>>, vector<1x32x32xf32>
    %48 = vector.shape_cast %47 : vector<1x32x32xf32> to vector<32x32xf32>
    %cst_20 = arith.constant dense<0.000000e+00> : vector<16x32xf32>
    %49 = tpu.matmul %46, %48, %cst_20 {dimension_numbers = #tpu.dot_dimension_numbers<[1], [0], [0], [1], [0, 0, 1, 1], [], []>} : vector<16x32xf32>, vector<32x32xf32>, vector<16x32xf32> -> vector<16x32xf32>
    %50 = vector.broadcast %14 : vector<1x32xf32> to vector<16x32xf32>
    %51 = arith.addf %49, %50 : vector<16x32xf32>
    %52 = arith.addf %51, %46 : vector<16x32xf32>
    %cst_21 = arith.constant dense<0.000000e+00> : vector<16xf32>
    %53 = vector.multi_reduction <add>, %52, %cst_21 [1] : vector<16x32xf32> to vector<16xf32>
    %54 = vector.shape_cast %53 : vector<16xf32> to vector<16x1xf32>
    %cst_22 = arith.constant 3.200000e+01 : f32
    %55 = vector.broadcast %cst_22 : f32 to vector<16x1xf32>
    %56 = arith.divf %54, %55 : vector<16x1xf32>
    %57 = vector.broadcast %56 : vector<16x1xf32> to vector<16x32xf32>
    %58 = arith.subf %52, %57 : vector<16x32xf32>
    %59 = vector.broadcast %56 : vector<16x1xf32> to vector<16x32xf32>
    %60 = arith.subf %52, %59 : vector<16x32xf32>
    %61 = arith.mulf %58, %60 : vector<16x32xf32>
    %cst_23 = arith.constant dense<0.000000e+00> : vector<16xf32>
    %62 = vector.multi_reduction <add>, %61, %cst_23 [1] : vector<16x32xf32> to vector<16xf32>
    %63 = vector.shape_cast %62 : vector<16xf32> to vector<16x1xf32>
    %cst_24 = arith.constant 3.200000e+01 : f32
    %64 = vector.broadcast %cst_24 : f32 to vector<16x1xf32>
    %65 = arith.divf %63, %64 : vector<16x1xf32>
    %66 = vector.broadcast %56 : vector<16x1xf32> to vector<16x32xf32>
    %67 = arith.subf %52, %66 : vector<16x32xf32>
    %cst_25 = arith.constant 9.99999974E-6 : f32
    %68 = vector.broadcast %cst_25 : f32 to vector<16x1xf32>
    %69 = arith.addf %65, %68 : vector<16x1xf32>
    %70 = math.rsqrt %69 : vector<16x1xf32>
    %71 = vector.broadcast %70 : vector<16x1xf32> to vector<16x32xf32>
    %72 = arith.mulf %67, %71 : vector<16x32xf32>
    %73 = vector.broadcast %12 : vector<1x32xf32> to vector<16x32xf32>
    %74 = arith.mulf %72, %73 : vector<16x32xf32>
    %75 = vector.broadcast %13 : vector<1x32xf32> to vector<16x32xf32>
    %76 = arith.addf %74, %75 : vector<16x32xf32>
    %77 = vector.extract_strided_slice %9 {offsets = [1, 0], sizes = [1, 32], strides = [1, 1]} : vector<6x128xf32> to vector<1x32xf32>
    %78 = vector.extract_strided_slice %9 {offsets = [1, 32], sizes = [1, 32], strides = [1, 1]} : vector<6x128xf32> to vector<1x32xf32>
    %79 = vector.extract_strided_slice %9 {offsets = [1, 64], sizes = [1, 32], strides = [1, 1]} : vector<6x128xf32> to vector<1x32xf32>
    %80 = vector.extract_strided_slice %9 {offsets = [1, 96], sizes = [1, 32], strides = [1, 1]} : vector<6x128xf32> to vector<1x32xf32>
    %81 = vector.extract_strided_slice %9 {offsets = [3, 0], sizes = [1, 32], strides = [1, 1]} : vector<6x128xf32> to vector<1x32xf32>
    %82 = vector.extract_strided_slice %76 {offsets = [0, 0], sizes = [8, 32], strides = [1, 1]} : vector<16x32xf32> to vector<8x32xf32>
    %cst_26 = arith.constant dense<0.000000e+00> : vector<8x32xf32>
    %83 = tpu.matmul %8, %82, %cst_26 {dimension_numbers = #tpu.dot_dimension_numbers<[1], [0], [0], [1], [0, 0, 1, 1], [], []>} : vector<8x8xf32>, vector<8x32xf32>, vector<8x32xf32> -> vector<8x32xf32>
    %84 = vector.extract_strided_slice %76 {offsets = [8, 0], sizes = [8, 32], strides = [1, 1]} : vector<16x32xf32> to vector<8x32xf32>
    %cst_27 = arith.constant dense<0.000000e+00> : vector<8x32xf32>
    %85 = tpu.matmul %8, %84, %cst_27 {dimension_numbers = #tpu.dot_dimension_numbers<[1], [0], [0], [1], [0, 0, 1, 1], [], []>} : vector<8x8xf32>, vector<8x32xf32>, vector<8x32xf32> -> vector<8x32xf32>
    %86 = tpu.concatenate %83, %85 in 0 : vector<8x32xf32>, vector<8x32xf32> -> vector<16x32xf32>
    %c1 = arith.constant 1 : index
    %c0_28 = arith.constant 0 : index
    %c0_29 = arith.constant 0 : index
    %87 = vector.load %arg3[%c1, %c0_28, %c0_29] : memref<2x16x32xf32, #tpu.memory_space<vmem>>, vector<1x16x32xf32>
    %88 = vector.shape_cast %87 : vector<1x16x32xf32> to vector<16x32xf32>
    %89 = arith.addf %86, %88 : vector<16x32xf32>
    %cst_30 = arith.constant dense<0.000000e+00> : vector<16xf32>
    %90 = vector.multi_reduction <add>, %89, %cst_30 [1] : vector<16x32xf32> to vector<16xf32>
    %91 = vector.shape_cast %90 : vector<16xf32> to vector<16x1xf32>
    %cst_31 = arith.constant 3.200000e+01 : f32
    %92 = vector.broadcast %cst_31 : f32 to vector<16x1xf32>
    %93 = arith.divf %91, %92 : vector<16x1xf32>
    %94 = vector.broadcast %93 : vector<16x1xf32> to vector<16x32xf32>
    %95 = arith.subf %89, %94 : vector<16x32xf32>
    %96 = vector.broadcast %93 : vector<16x1xf32> to vector<16x32xf32>
    %97 = arith.subf %89, %96 : vector<16x32xf32>
    %98 = arith.mulf %95, %97 : vector<16x32xf32>
    %cst_32 = arith.constant dense<0.000000e+00> : vector<16xf32>
    %99 = vector.multi_reduction <add>, %98, %cst_32 [1] : vector<16x32xf32> to vector<16xf32>
    %100 = vector.shape_cast %99 : vector<16xf32> to vector<16x1xf32>
    %cst_33 = arith.constant 3.200000e+01 : f32
    %101 = vector.broadcast %cst_33 : f32 to vector<16x1xf32>
    %102 = arith.divf %100, %101 : vector<16x1xf32>
    %103 = vector.broadcast %93 : vector<16x1xf32> to vector<16x32xf32>
    %104 = arith.subf %89, %103 : vector<16x32xf32>
    %cst_34 = arith.constant 9.99999974E-6 : f32
    %105 = vector.broadcast %cst_34 : f32 to vector<16x1xf32>
    %106 = arith.addf %102, %105 : vector<16x1xf32>
    %107 = math.rsqrt %106 : vector<16x1xf32>
    %108 = vector.broadcast %107 : vector<16x1xf32> to vector<16x32xf32>
    %109 = arith.mulf %104, %108 : vector<16x32xf32>
    %110 = vector.broadcast %77 : vector<1x32xf32> to vector<16x32xf32>
    %111 = arith.mulf %109, %110 : vector<16x32xf32>
    %112 = vector.broadcast %78 : vector<1x32xf32> to vector<16x32xf32>
    %113 = arith.addf %111, %112 : vector<16x32xf32>
    %c1_35 = arith.constant 1 : index
    %c0_36 = arith.constant 0 : index
    %c0_37 = arith.constant 0 : index
    %114 = vector.load %arg4[%c1_35, %c0_36, %c0_37] : memref<2x32x32xf32, #tpu.memory_space<vmem>>, vector<1x32x32xf32>
    %115 = vector.shape_cast %114 : vector<1x32x32xf32> to vector<32x32xf32>
    %cst_38 = arith.constant dense<0.000000e+00> : vector<16x32xf32>
    %116 = tpu.matmul %113, %115, %cst_38 {dimension_numbers = #tpu.dot_dimension_numbers<[1], [0], [0], [1], [0, 0, 1, 1], [], []>} : vector<16x32xf32>, vector<32x32xf32>, vector<16x32xf32> -> vector<16x32xf32>
    %117 = vector.broadcast %81 : vector<1x32xf32> to vector<16x32xf32>
    %118 = arith.addf %116, %117 : vector<16x32xf32>
    %119 = arith.addf %118, %113 : vector<16x32xf32>
    %cst_39 = arith.constant dense<0.000000e+00> : vector<16xf32>
    %120 = vector.multi_reduction <add>, %119, %cst_39 [1] : vector<16x32xf32> to vector<16xf32>
    %121 = vector.shape_cast %120 : vector<16xf32> to vector<16x1xf32>
    %cst_40 = arith.constant 3.200000e+01 : f32
    %122 = vector.broadcast %cst_40 : f32 to vector<16x1xf32>
    %123 = arith.divf %121, %122 : vector<16x1xf32>
    %124 = vector.broadcast %123 : vector<16x1xf32> to vector<16x32xf32>
    %125 = arith.subf %119, %124 : vector<16x32xf32>
    %126 = vector.broadcast %123 : vector<16x1xf32> to vector<16x32xf32>
    %127 = arith.subf %119, %126 : vector<16x32xf32>
    %128 = arith.mulf %125, %127 : vector<16x32xf32>
    %cst_41 = arith.constant dense<0.000000e+00> : vector<16xf32>
    %129 = vector.multi_reduction <add>, %128, %cst_41 [1] : vector<16x32xf32> to vector<16xf32>
    %130 = vector.shape_cast %129 : vector<16xf32> to vector<16x1xf32>
    %cst_42 = arith.constant 3.200000e+01 : f32
    %131 = vector.broadcast %cst_42 : f32 to vector<16x1xf32>
    %132 = arith.divf %130, %131 : vector<16x1xf32>
    %133 = vector.broadcast %123 : vector<16x1xf32> to vector<16x32xf32>
    %134 = arith.subf %119, %133 : vector<16x32xf32>
    %cst_43 = arith.constant 9.99999974E-6 : f32
    %135 = vector.broadcast %cst_43 : f32 to vector<16x1xf32>
    %136 = arith.addf %132, %135 : vector<16x1xf32>
    %137 = math.rsqrt %136 : vector<16x1xf32>
    %138 = vector.broadcast %137 : vector<16x1xf32> to vector<16x32xf32>
    %139 = arith.mulf %134, %138 : vector<16x32xf32>
    %140 = vector.broadcast %79 : vector<1x32xf32> to vector<16x32xf32>
    %141 = arith.mulf %139, %140 : vector<16x32xf32>
    %142 = vector.broadcast %80 : vector<1x32xf32> to vector<16x32xf32>
    %143 = arith.addf %141, %142 : vector<16x32xf32>
    %144 = vector.extract_strided_slice %9 {offsets = [4, 0], sizes = [1, 32], strides = [1, 1]} : vector<6x128xf32> to vector<1x32xf32>
    %145 = vector.extract_strided_slice %9 {offsets = [4, 32], sizes = [1, 32], strides = [1, 1]} : vector<6x128xf32> to vector<1x32xf32>
    %146 = vector.extract_strided_slice %9 {offsets = [5, 0], sizes = [1, 128], strides = [1, 1]} : vector<6x128xf32> to vector<1x128xf32>
    %cst_44 = arith.constant dense<0.000000e+00> : vector<16xf32>
    %147 = vector.multi_reduction <add>, %143, %cst_44 [1] : vector<16x32xf32> to vector<16xf32>
    %148 = vector.shape_cast %147 : vector<16xf32> to vector<16x1xf32>
    %cst_45 = arith.constant 3.200000e+01 : f32
    %149 = vector.broadcast %cst_45 : f32 to vector<16x1xf32>
    %150 = arith.divf %148, %149 : vector<16x1xf32>
    %151 = vector.broadcast %150 : vector<16x1xf32> to vector<16x32xf32>
    %152 = arith.subf %143, %151 : vector<16x32xf32>
    %153 = vector.broadcast %150 : vector<16x1xf32> to vector<16x32xf32>
    %154 = arith.subf %143, %153 : vector<16x32xf32>
    %155 = arith.mulf %152, %154 : vector<16x32xf32>
    %cst_46 = arith.constant dense<0.000000e+00> : vector<16xf32>
    %156 = vector.multi_reduction <add>, %155, %cst_46 [1] : vector<16x32xf32> to vector<16xf32>
    %157 = vector.shape_cast %156 : vector<16xf32> to vector<16x1xf32>
    %cst_47 = arith.constant 3.200000e+01 : f32
    %158 = vector.broadcast %cst_47 : f32 to vector<16x1xf32>
    %159 = arith.divf %157, %158 : vector<16x1xf32>
    %160 = vector.broadcast %150 : vector<16x1xf32> to vector<16x32xf32>
    %161 = arith.subf %143, %160 : vector<16x32xf32>
    %cst_48 = arith.constant 9.99999974E-6 : f32
    %162 = vector.broadcast %cst_48 : f32 to vector<16x1xf32>
    %163 = arith.addf %159, %162 : vector<16x1xf32>
    %164 = math.rsqrt %163 : vector<16x1xf32>
    %165 = vector.broadcast %164 : vector<16x1xf32> to vector<16x32xf32>
    %166 = arith.mulf %161, %165 : vector<16x32xf32>
    %167 = vector.broadcast %144 : vector<1x32xf32> to vector<16x32xf32>
    %168 = arith.mulf %166, %167 : vector<16x32xf32>
    %169 = vector.broadcast %145 : vector<1x32xf32> to vector<16x32xf32>
    %170 = arith.addf %168, %169 : vector<16x32xf32>
    %c0_49 = arith.constant 0 : index
    %c0_50 = arith.constant 0 : index
    %171 = vector.load %arg6[%c0_49, %c0_50] : memref<32x128xf32, #tpu.memory_space<vmem>>, vector<32x128xf32>
    %cst_51 = arith.constant dense<0.000000e+00> : vector<16x128xf32>
    %172 = tpu.matmul %170, %171, %cst_51 {dimension_numbers = #tpu.dot_dimension_numbers<[1], [0], [0], [1], [0, 0, 1, 1], [], []>} : vector<16x32xf32>, vector<32x128xf32>, vector<16x128xf32> -> vector<16x128xf32>
    %173 = vector.broadcast %146 : vector<1x128xf32> to vector<16x128xf32>
    %174 = arith.addf %172, %173 : vector<16x128xf32>
    %c0_52 = arith.constant 0 : index
    %c0_53 = arith.constant 0 : index
    %175 = vector.load %arg7[%c0_52, %c0_53] : memref<16x128xf32, #tpu.memory_space<vmem>>, vector<16x128xf32>
    tpu.vector_store %arg7[%c0_52, %c0_53], %174 {strides = array<i32>} : memref<16x128xf32, #tpu.memory_space<vmem>>, vector<16x128xf32>,
    return
  }
}

</mosaic_0001>

<llo_original>
// kernel: enhanced_tfn_forward.1
$region0: #{enhanced_tfn_forward.1}
  #allocation0 [shape = 'u32[]', space=smem, size = 0x4, offset = 0x4, fixed_abs, tag = 'smem constant byte address 0x4 - core index']
  #allocation1 [shape = 'u32[72,128]{1,0:T(1,128)}', space=vmem, size = 0x9000, scoped, tag = 'internal scratch']
  %s0 = inlined_call_operand.vmem [shape: s32[16,1], index: 0, kind: input, shape index: {}]
  %s1 = inlined_call_operand.vmem [shape: f32[64,32], index: 1, kind: input, shape index: {}]
  %s2 = inlined_call_operand.vmem [shape: f32[8,8], index: 2, kind: input, shape index: {}]
  %s3 = inlined_call_operand.vmem [shape: f32[2,16,32], index: 3, kind: input, shape index: {}]
  %s4 = inlined_call_operand.vmem [shape: f32[2,32,32], index: 4, kind: input, shape index: {}]
  %s5 = inlined_call_operand.vmem [shape: f32[6,128], index: 5, kind: input, shape index: {}]
  %s6 = inlined_call_operand.hbm [shape: f32[32,128], index: 6, kind: input, shape index: {}]
  %s7 = inlined_call_operand.vmem [shape: f32[16,128], index: 7, kind: output, shape index: {}]
  %s8 = sld [smem:[#allocation0]]
  $region42: #{enhanced_tfn_forward.1} parent=0
    _
  %s10 = ssub.s32 1, %s8
  %s11 = scalar_select 0, %s10, %s8
  $region1: #{enhanced_tfn_forward.1} parent=0
    #allocation2 [shape = 'u8[16384]{0}', space=vmem, size = 0x4000, scoped, tag = 'input window, operand 6, single buffered']
    #allocation3 [shape = 's32[1]{0}', space=sflag, size = 0x4, scoped, tag = 'scoped memory for enhanced_tfn_forward.1']
    %12 = vsyncpa [#allocation3], 0
    // Predicated region
    $region2: #{enhanced_tfn_forward.1} parent=1 // pred_check
      _
    $region3: #{enhanced_tfn_forward.1} parent=1 // pred_check_branch
      %14 = sbr.rel (0) target = $region5
    $region4: #{enhanced_tfn_forward.1} parent=1 // pred_region
      _
    $region5: #{enhanced_tfn_forward.1} parent=1 // pred_fallthru
      _
    // Predicated region
    $region6: #{enhanced_tfn_forward.1} parent=1 // pred_check
      _
    $region7: #{enhanced_tfn_forward.1} parent=1 // pred_check_branch
      %16 = sbr.rel (0) target = $region9
    $region8: #{enhanced_tfn_forward.1} parent=1 // pred_region
      _
    $region9: #{enhanced_tfn_forward.1} parent=1 // pred_fallthru
      _
    // Predicated region
    $region10: #{enhanced_tfn_forward.1} parent=1 // pred_check
      _
    $region11: #{enhanced_tfn_forward.1} parent=1 // pred_check_branch
      %18 = sbr.rel (0) target = $region13
    $region12: #{enhanced_tfn_forward.1} parent=1 // pred_region
      _
    $region13: #{enhanced_tfn_forward.1} parent=1 // pred_fallthru
      _
    // Predicated region
    $region14: #{enhanced_tfn_forward.1} parent=1 // pred_check
      _
    $region15: #{enhanced_tfn_forward.1} parent=1 // pred_check_branch
      %20 = sbr.rel (0) target = $region17
    $region16: #{enhanced_tfn_forward.1} parent=1 // pred_region
      _
    $region17: #{enhanced_tfn_forward.1} parent=1 // pred_fallthru
      _
    // Predicated region
    $region18: #{enhanced_tfn_forward.1} parent=1 // pred_check
      _
    $region19: #{enhanced_tfn_forward.1} parent=1 // pred_check_branch
      %22 = sbr.rel (0) target = $region21
    $region20: #{enhanced_tfn_forward.1} parent=1 // pred_region
      _
    $region21: #{enhanced_tfn_forward.1} parent=1 // pred_fallthru
      _
    // Predicated region
    $region22: #{enhanced_tfn_forward.1} parent=1 // pred_check
      _
    $region23: #{enhanced_tfn_forward.1} parent=1 // pred_check_branch
      %24 = sbr.rel (0) target = $region25
    $region24: #{enhanced_tfn_forward.1} parent=1 // pred_region
      _
    $region25: #{enhanced_tfn_forward.1} parent=1 // pred_fallthru
      _
    // Predicated region
    $region26: #{enhanced_tfn_forward.1} parent=1 // pred_check
      _
    $region27: #{enhanced_tfn_forward.1} parent=1 // pred_check_branch
      %26 = sbr.rel (0) target = $region29
    $region28: #{enhanced_tfn_forward.1} parent=1 // pred_region
      %28 = vsyncadd [#allocation3], 0
      %s29 = sshll.u32 %s6, 4
      %s30 = int_to_ptr.hbm [resolvable:$true] %s29
      %s31 = sshll.u32 [#allocation2], 4
      %s32 = int_to_ptr.vmem [resolvable:$true] %s31
      %37 = dma.hbm_to_vmem [thread:$0]  %s30, 512, %s32, [#allocation3], 128, 128, 8
    $region29: #{enhanced_tfn_forward.1} parent=1 // pred_fallthru
      _
    // Predicated region
    $region30: #{enhanced_tfn_forward.1} parent=1 // pred_check
      _
    $region31: #{enhanced_tfn_forward.1} parent=1 // pred_check_branch
      %39 = sbr.rel (0) target = $region33
    $region32: #{enhanced_tfn_forward.1} parent=1 // pred_region
      %41 = dma.done [#allocation3], 512
    $region33: #{enhanced_tfn_forward.1} parent=1 // pred_fallthru
      _
    %v42 = vld [vmem:[%s0] sm:$0xff]
    %v43 = vld [vmem:[%s0 + $0x8] sm:$0xff]
    %v44 = vlaneseq
    %v45 = vand.u32 %v44, 127
    %46 = vset.pattern.permute.xlu0 0
    %47 = vperm.xlu0 %46, %v42
    %v48 = vpop.permute.xlu0 %47
    %49 = vset.pattern.permute.xlu0 0
    %50 = vperm.xlu0 %49, %v43
    %v51 = vpop.permute.xlu0 %50
    %vm52 = vcmp.eq.s32.totalorder %v45, %v48
    %vm53 = vcmp.eq.s32.totalorder %v45, %v51
    %v54 = vsel %vm52, 1, 0
    %v55 = vsel %vm53, 1, 0
    %v56 = vcvt.s32.f32 %v54
    %v57 = vcvt.s32.f32 %v55
    %v58 = vld [vmem:[%s1] sm:$0xff]
    %v59 = vld [vmem:[%s1 + $0x8] sm:$0xff]
    %v60 = vld [vmem:[%s1 + $0x10] sm:$0xff]
    %v61 = vld [vmem:[%s1 + $0x18] sm:$0xff]
    %v62 = vld [vmem:[%s1 + $0x20] sm:$0xff]
    %v63 = vld [vmem:[%s1 + $0x28] sm:$0xff]
    %v64 = vld [vmem:[%s1 + $0x30] sm:$0xff]
    %v65 = vld [vmem:[%s1 + $0x38] sm:$0xff]
    %vm66 = vcmask 523264
    %v68 = vsel %vm66, %v56, 0
    %v71 = vsel %vm66, %v57, 0
    %73 = vmatpush.msra.mxu0 0.0
    %74 = vmatpush.msra.mxu0 0.0
    %75 = vmatpush.msra.mxu0 0.0
    %76 = vmatpush.msra.mxu0 0.0
    %77 = vmatpush.msra.mxu0 0.0
    %78 = vmatpush.msra.mxu0 0.0
    %79 = vmatpush.msra.mxu0 0.0
    %80 = vmatpush.msra.mxu0 0.0
    %81 = vmatpush.msra.mxu0 %v65
    %82 = vmatpush.msra.mxu0 %v64
    %83 = vmatpush.msra.mxu0 %v63
    %84 = vmatpush.msra.mxu0 %v62
    %85 = vmatpush.msra.mxu0 %v61
    %86 = vmatpush.msra.mxu0 %v60
    %87 = vmatpush.msra.mxu0 %v59
    %88 = vmatpush.msra.mxu0 %v58
    %89 = vmatmul.f32.gmra.mxu0 %v68
    %v90 = vpop.f32.mrf.mxu0
    %v91 = vadd.f32 0.0, %v90
    %92 = vmatmul.f32.gmra.mxu0 %v71
    %v93 = vpop.f32.mrf.mxu0
    %v94 = vadd.f32 0.0, %v93
    %95 = vdwg.mxu0
    %v96 = vld [vmem:[%s2] sm:$0xff]
    %v97 = vld [vmem:[%s5] sm:$0x3f]
    %vm98 = vcmask 64512
    %v100 = vsel %vm98, %v96, 0
    %102 = vmatpush.msra.mxu0 0.0
    %103 = vmatpush.msra.mxu0 0.0
    %104 = vmatpush.msra.mxu0 0.0
    %105 = vmatpush.msra.mxu0 0.0
    %106 = vmatpush.msra.mxu0 0.0
    %107 = vmatpush.msra.mxu0 0.0
    %108 = vmatpush.msra.mxu0 0.0
    %109 = vmatpush.msra.mxu0 0.0
    %110 = vmatpush.msra.mxu0 0.0
    %111 = vmatpush.msra.mxu0 0.0
    %112 = vmatpush.msra.mxu0 0.0
    %113 = vmatpush.msra.mxu0 0.0
    %114 = vmatpush.msra.mxu0 0.0
    %115 = vmatpush.msra.mxu0 0.0
    %116 = vmatpush.msra.mxu0 0.0
    %117 = vmatpush.msra.mxu0 %v91
    %118 = vmatmul.f32.gmra.mxu0 %v100
    %v119 = vpop.f32.mrf.mxu0
    %v120 = vadd.f32 0.0, %v119
    %121 = vdwg.mxu0
    %122 = vmatpush.msra.mxu0 0.0
    %123 = vmatpush.msra.mxu0 0.0
    %124 = vmatpush.msra.mxu0 0.0
    %125 = vmatpush.msra.mxu0 0.0
    %126 = vmatpush.msra.mxu0 0.0
    %127 = vmatpush.msra.mxu0 0.0
    %128 = vmatpush.msra.mxu0 0.0
    %129 = vmatpush.msra.mxu0 0.0
    %130 = vmatpush.msra.mxu0 0.0
    %131 = vmatpush.msra.mxu0 0.0
    %132 = vmatpush.msra.mxu0 0.0
    %133 = vmatpush.msra.mxu0 0.0
    %134 = vmatpush.msra.mxu0 0.0
    %135 = vmatpush.msra.mxu0 0.0
    %136 = vmatpush.msra.mxu0 0.0
    %137 = vmatpush.msra.mxu0 %v94
    %138 = vmatmul.f32.gmra.mxu0 %v100
    %v139 = vpop.f32.mrf.mxu0
    %v140 = vadd.f32 0.0, %v139
    %141 = vdwg.mxu0
    %v142 = vld [vmem:[%s3] sm:$0xff]
    %v143 = vld [vmem:[%s3 + $0x8] sm:$0xff]
    %v144 = vadd.f32 %v120, %v142
    %v145 = vadd.f32 %v140, %v143
    %vm146 = vcmask 261120
    %v147 = vsel %vm146, %v144, 0.0
    %148 = vadd.xlane.f32.xlu0 %v147
    %v149 = vpop.xlane.xlu0 %148
    %v150 = vsel %vm146, %v145, 0.0
    %151 = vadd.xlane.f32.xlu0 %v150
    %v152 = vpop.xlane.xlu0 %151
    %v153 = vrcp.pop 32.0
    %v154 = vmul.f32 32.0, %v153
    %v155 = vsub.f32 1.0, %v154
    %v156 = vmul.f32 %v153, %v155
    %v157 = vadd.f32 %v153, %v156
    %vm158 = vweird.f32 %v153
    %v159 = vsel %vm158, %v153, %v157
    %v160 = vmul.f32 %v149, %v159
    %v161 = vmul.f32 %v152, %v159
    %v162 = vsub.f32 %v144, %v160
    %v163 = vsub.f32 %v145, %v161
    %v164 = vmul.f32 %v162, %v162
    %v165 = vmul.f32 %v163, %v163
    %v166 = vsel %vm146, %v164, 0.0
    %167 = vadd.xlane.f32.xlu0 %v166
    %v168 = vpop.xlane.xlu0 %167
    %v169 = vsel %vm146, %v165, 0.0
    %170 = vadd.xlane.f32.xlu0 %v169
    %v171 = vpop.xlane.xlu0 %170
    %v172 = vmul.f32 %v168, %v159
    %v173 = vmul.f32 %v171, %v159
    %v174 = vadd.f32 %v172, 1e-05
    %v175 = vadd.f32 %v173, 1e-05
    %v176 = vrsqrt.pop %v174
    %v177 = vmul.f32 %v176, %v174
    %v178 = vmul.f32 %v177, %v176
    %v179 = vmul.f32 0.5, %v178
    %v180 = vsub.f32 1.5, %v179
    %v181 = vmul.f32 %v176, %v180
    %vm182 = vweird.f32 %v174
    %vm183 = vweird.f32 %v176
    %vm184 = vmor %vm182, %vm183
    %v185 = vsel %vm184, %v176, %v181
    %v186 = vrsqrt.pop %v175
    %v187 = vmul.f32 %v186, %v175
    %v188 = vmul.f32 %v187, %v186
    %v189 = vmul.f32 0.5, %v188
    %v190 = vsub.f32 1.5, %v189
    %v191 = vmul.f32 %v186, %v190
    %vm192 = vweird.f32 %v175
    %vm193 = vweird.f32 %v186
    %vm194 = vmor %vm192, %vm193
    %v195 = vsel %vm194, %v186, %v191
    %v196 = vmul.f32 %v162, %v185
    %v197 = vmul.f32 %v163, %v195
    %v198 = vperm.slane %v97, 0
    %v199 = vmul.f32 %v196, %v198
    %v200 = vmul.f32 %v197, %v198
    %202 = vrot.lane.b32.xlu0 %v198, 96
    %v203 = vpop.permute.xlu0 %202
    %v205 = vadd.f32 %v199, %v203
    %v206 = vadd.f32 %v200, %v203
    %v207 = vld [vmem:[%s4] sm:$0xff]
    %v208 = vld [vmem:[%s4 + $0x8] sm:$0xff]
    %v209 = vld [vmem:[%s4 + $0x10] sm:$0xff]
    %v210 = vld [vmem:[%s4 + $0x18] sm:$0xff]
    %v211 = vperm.slane %v97, 2
    %v213 = vsel %vm146, %v205, 0
    %v216 = vsel %vm146, %v206, 0
    %218 = vmatpush.msra.mxu0 0.0
    %219 = vmatpush.msra.mxu0 0.0
    %220 = vmatpush.msra.mxu0 0.0
    %221 = vmatpush.msra.mxu0 0.0
    %222 = vmatpush.msra.mxu0 0.0
    %223 = vmatpush.msra.mxu0 0.0
    %224 = vmatpush.msra.mxu0 0.0
    %225 = vmatpush.msra.mxu0 0.0
    %226 = vmatpush.msra.mxu0 0.0
    %227 = vmatpush.msra.mxu0 0.0
    %228 = vmatpush.msra.mxu0 0.0
    %229 = vmatpush.msra.mxu0 0.0
    %230 = vmatpush.msra.mxu0 %v210
    %231 = vmatpush.msra.mxu0 %v209
    %232 = vmatpush.msra.mxu0 %v208
    %233 = vmatpush.msra.mxu0 %v207
    %234 = vmatmul.f32.gmra.mxu0 %v213
    %v235 = vpop.f32.mrf.mxu0
    %v236 = vadd.f32 %v211, %v235
    %237 = vmatmul.f32.gmra.mxu0 %v216
    %v238 = vpop.f32.mrf.mxu0
    %v239 = vadd.f32 %v211, %v238
    %240 = vdwg.mxu0
    %v241 = vadd.f32 %v236, %v205
    %v242 = vadd.f32 %v239, %v206
    %v243 = vsel %vm146, %v241, 0.0
    %244 = vadd.xlane.f32.xlu0 %v243
    %v245 = vpop.xlane.xlu0 %244
    %v246 = vsel %vm146, %v242, 0.0
    %247 = vadd.xlane.f32.xlu0 %v246
    %v248 = vpop.xlane.xlu0 %247
    %v249 = vmul.f32 %v245, %v159
    %v250 = vmul.f32 %v248, %v159
    %v251 = vsub.f32 %v241, %v249
    %v252 = vsub.f32 %v242, %v250
    %v253 = vmul.f32 %v251, %v251
    %v254 = vmul.f32 %v252, %v252
    %v255 = vsel %vm146, %v253, 0.0
    %256 = vadd.xlane.f32.xlu0 %v255
    %v257 = vpop.xlane.xlu0 %256
    %v258 = vsel %vm146, %v254, 0.0
    %259 = vadd.xlane.f32.xlu0 %v258
    %v260 = vpop.xlane.xlu0 %259
    %v261 = vmul.f32 %v257, %v159
    %v262 = vmul.f32 %v260, %v159
    %v263 = vadd.f32 %v261, 1e-05
    %v264 = vadd.f32 %v262, 1e-05
    %v265 = vrsqrt.pop %v263
    %v266 = vmul.f32 %v265, %v263
    %v267 = vmul.f32 %v266, %v265
    %v268 = vmul.f32 0.5, %v267
    %v269 = vsub.f32 1.5, %v268
    %v270 = vmul.f32 %v265, %v269
    %vm271 = vweird.f32 %v263
    %vm272 = vweird.f32 %v265
    %vm273 = vmor %vm271, %vm272
    %v274 = vsel %vm273, %v265, %v270
    %v275 = vrsqrt.pop %v264
    %v276 = vmul.f32 %v275, %v264
    %v277 = vmul.f32 %v276, %v275
    %v278 = vmul.f32 0.5, %v277
    %v279 = vsub.f32 1.5, %v278
    %v280 = vmul.f32 %v275, %v279
    %vm281 = vweird.f32 %v264
    %vm282 = vweird.f32 %v275
    %vm283 = vmor %vm281, %vm282
    %v284 = vsel %vm283, %v275, %v280
    %v285 = vmul.f32 %v251, %v274
    %v286 = vmul.f32 %v252, %v284
    %287 = vrot.lane.b32.xlu0 %v198, 64
    %v288 = vpop.permute.xlu0 %287
    %v290 = vmul.f32 %v285, %v288
    %v291 = vmul.f32 %v286, %v288
    %292 = vrot.lane.b32.xlu0 %v198, 32
    %v293 = vpop.permute.xlu0 %292
    %v295 = vadd.f32 %v290, %v293
    %v296 = vadd.f32 %v291, %v293
    %297 = vmatpush.msra.mxu0 0.0
    %298 = vmatpush.msra.mxu0 0.0
    %299 = vmatpush.msra.mxu0 0.0
    %300 = vmatpush.msra.mxu0 0.0
    %301 = vmatpush.msra.mxu0 0.0
    %302 = vmatpush.msra.mxu0 0.0
    %303 = vmatpush.msra.mxu0 0.0
    %304 = vmatpush.msra.mxu0 0.0
    %305 = vmatpush.msra.mxu0 0.0
    %306 = vmatpush.msra.mxu0 0.0
    %307 = vmatpush.msra.mxu0 0.0
    %308 = vmatpush.msra.mxu0 0.0
    %309 = vmatpush.msra.mxu0 0.0
    %310 = vmatpush.msra.mxu0 0.0
    %311 = vmatpush.msra.mxu0 0.0
    %312 = vmatpush.msra.mxu0 %v295
    %313 = vmatmul.f32.gmra.mxu0 %v100
    %v314 = vpop.f32.mrf.mxu0
    %v315 = vadd.f32 0.0, %v314
    %316 = vdwg.mxu0
    %317 = vmatpush.msra.mxu0 0.0
    %318 = vmatpush.msra.mxu0 0.0
    %319 = vmatpush.msra.mxu0 0.0
    %320 = vmatpush.msra.mxu0 0.0
    %321 = vmatpush.msra.mxu0 0.0
    %322 = vmatpush.msra.mxu0 0.0
    %323 = vmatpush.msra.mxu0 0.0
    %324 = vmatpush.msra.mxu0 0.0
    %325 = vmatpush.msra.mxu0 0.0
    %326 = vmatpush.msra.mxu0 0.0
    %327 = vmatpush.msra.mxu0 0.0
    %328 = vmatpush.msra.mxu0 0.0
    %329 = vmatpush.msra.mxu0 0.0
    %330 = vmatpush.msra.mxu0 0.0
    %331 = vmatpush.msra.mxu0 0.0
    %332 = vmatpush.msra.mxu0 %v296
    %333 = vmatmul.f32.gmra.mxu0 %v100
    %v334 = vpop.f32.mrf.mxu0
    %v335 = vadd.f32 0.0, %v334
    %336 = vdwg.mxu0
    %s337 = scalar_lea.vmem %s3, 16
    %v338 = vld [vmem:[%s337] sm:$0xff]
    %v339 = vld [vmem:[%s337 + $0x8] sm:$0xff]
    %v340 = vadd.f32 %v315, %v338
    %v341 = vadd.f32 %v335, %v339
    %v342 = vsel %vm146, %v340, 0.0
    %343 = vadd.xlane.f32.xlu0 %v342
    %v344 = vpop.xlane.xlu0 %343
    %v345 = vsel %vm146, %v341, 0.0
    %346 = vadd.xlane.f32.xlu0 %v345
    %v347 = vpop.xlane.xlu0 %346
    %v348 = vmul.f32 %v344, %v159
    %v349 = vmul.f32 %v347, %v159
    %v350 = vsub.f32 %v340, %v348
    %v351 = vsub.f32 %v341, %v349
    %v352 = vmul.f32 %v350, %v350
    %v353 = vmul.f32 %v351, %v351
    %v354 = vsel %vm146, %v352, 0.0
    %355 = vadd.xlane.f32.xlu0 %v354
    %v356 = vpop.xlane.xlu0 %355
    %v357 = vsel %vm146, %v353, 0.0
    %358 = vadd.xlane.f32.xlu0 %v357
    %v359 = vpop.xlane.xlu0 %358
    %v360 = vmul.f32 %v356, %v159
    %v361 = vmul.f32 %v359, %v159
    %v362 = vadd.f32 %v360, 1e-05
    %v363 = vadd.f32 %v361, 1e-05
    %v364 = vrsqrt.pop %v362
    %v365 = vmul.f32 %v364, %v362
    %v366 = vmul.f32 %v365, %v364
    %v367 = vmul.f32 0.5, %v366
    %v368 = vsub.f32 1.5, %v367
    %v369 = vmul.f32 %v364, %v368
    %vm370 = vweird.f32 %v362
    %vm371 = vweird.f32 %v364
    %vm372 = vmor %vm370, %vm371
    %v373 = vsel %vm372, %v364, %v369
    %v374 = vrsqrt.pop %v363
    %v375 = vmul.f32 %v374, %v363
    %v376 = vmul.f32 %v375, %v374
    %v377 = vmul.f32 0.5, %v376
    %v378 = vsub.f32 1.5, %v377
    %v379 = vmul.f32 %v374, %v378
    %vm380 = vweird.f32 %v363
    %vm381 = vweird.f32 %v374
    %vm382 = vmor %vm380, %vm381
    %v383 = vsel %vm382, %v374, %v379
    %v384 = vmul.f32 %v350, %v373
    %v385 = vmul.f32 %v351, %v383
    %v386 = vperm.slane %v97, 1
    %v387 = vmul.f32 %v384, %v386
    %v388 = vmul.f32 %v385, %v386
    %390 = vrot.lane.b32.xlu0 %v386, 96
    %v391 = vpop.permute.xlu0 %390
    %v393 = vadd.f32 %v387, %v391
    %v394 = vadd.f32 %v388, %v391
    %s395 = scalar_lea.vmem %s4, 32
    %v396 = vld [vmem:[%s395] sm:$0xff]
    %v397 = vld [vmem:[%s395 + $0x8] sm:$0xff]
    %v398 = vld [vmem:[%s395 + $0x10] sm:$0xff]
    %v399 = vld [vmem:[%s395 + $0x18] sm:$0xff]
    %v400 = vperm.slane %v97, 3
    %v402 = vsel %vm146, %v393, 0
    %v405 = vsel %vm146, %v394, 0
    %407 = vmatpush.msra.mxu0 0.0
    %408 = vmatpush.msra.mxu0 0.0
    %409 = vmatpush.msra.mxu0 0.0
    %410 = vmatpush.msra.mxu0 0.0
    %411 = vmatpush.msra.mxu0 0.0
    %412 = vmatpush.msra.mxu0 0.0
    %413 = vmatpush.msra.mxu0 0.0
    %414 = vmatpush.msra.mxu0 0.0
    %415 = vmatpush.msra.mxu0 0.0
    %416 = vmatpush.msra.mxu0 0.0
    %417 = vmatpush.msra.mxu0 0.0
    %418 = vmatpush.msra.mxu0 0.0
    %419 = vmatpush.msra.mxu0 %v399
    %420 = vmatpush.msra.mxu0 %v398
    %421 = vmatpush.msra.mxu0 %v397
    %422 = vmatpush.msra.mxu0 %v396
    %423 = vmatmul.f32.gmra.mxu0 %v402
    %v424 = vpop.f32.mrf.mxu0
    %v425 = vadd.f32 %v400, %v424
    %426 = vmatmul.f32.gmra.mxu0 %v405
    %v427 = vpop.f32.mrf.mxu0
    %v428 = vadd.f32 %v400, %v427
    %429 = vdwg.mxu0
    %v430 = vadd.f32 %v425, %v393
    %v431 = vadd.f32 %v428, %v394
    %v432 = vsel %vm146, %v430, 0.0
    %433 = vadd.xlane.f32.xlu0 %v432
    %v434 = vpop.xlane.xlu0 %433
    %v435 = vsel %vm146, %v431, 0.0
    %436 = vadd.xlane.f32.xlu0 %v435
    %v437 = vpop.xlane.xlu0 %436
    %v438 = vmul.f32 %v434, %v159
    %v439 = vmul.f32 %v437, %v159
    %v440 = vsub.f32 %v430, %v438
    %v441 = vsub.f32 %v431, %v439
    %v442 = vmul.f32 %v440, %v440
    %v443 = vmul.f32 %v441, %v441
    %v444 = vsel %vm146, %v442, 0.0
    %445 = vadd.xlane.f32.xlu0 %v444
    %v446 = vpop.xlane.xlu0 %445
    %v447 = vsel %vm146, %v443, 0.0
    %448 = vadd.xlane.f32.xlu0 %v447
    %v449 = vpop.xlane.xlu0 %448
    %v450 = vmul.f32 %v446, %v159
    %v451 = vmul.f32 %v449, %v159
    %v452 = vadd.f32 %v450, 1e-05
    %v453 = vadd.f32 %v451, 1e-05
    %v454 = vrsqrt.pop %v452
    %v455 = vmul.f32 %v454, %v452
    %v456 = vmul.f32 %v455, %v454
    %v457 = vmul.f32 0.5, %v456
    %v458 = vsub.f32 1.5, %v457
    %v459 = vmul.f32 %v454, %v458
    %vm460 = vweird.f32 %v452
    %vm461 = vweird.f32 %v454
    %vm462 = vmor %vm460, %vm461
    %v463 = vsel %vm462, %v454, %v459
    %v464 = vrsqrt.pop %v453
    %v465 = vmul.f32 %v464, %v453
    %v466 = vmul.f32 %v465, %v464
    %v467 = vmul.f32 0.5, %v466
    %v468 = vsub.f32 1.5, %v467
    %v469 = vmul.f32 %v464, %v468
    %vm470 = vweird.f32 %v453
    %vm471 = vweird.f32 %v464
    %vm472 = vmor %vm470, %vm471
    %v473 = vsel %vm472, %v464, %v469
    %v474 = vmul.f32 %v440, %v463
    %v475 = vmul.f32 %v441, %v473
    %476 = vrot.lane.b32.xlu0 %v386, 64
    %v477 = vpop.permute.xlu0 %476
    %v479 = vmul.f32 %v474, %v477
    %v480 = vmul.f32 %v475, %v477
    %481 = vrot.lane.b32.xlu0 %v386, 32
    %v482 = vpop.permute.xlu0 %481
    %v484 = vadd.f32 %v479, %v482
    %v485 = vadd.f32 %v480, %v482
    %v486 = vsel %vm146, %v484, 0.0
    %487 = vadd.xlane.f32.xlu0 %v486
    %v488 = vpop.xlane.xlu0 %487
    %v489 = vsel %vm146, %v485, 0.0
    %490 = vadd.xlane.f32.xlu0 %v489
    %v491 = vpop.xlane.xlu0 %490
    %v492 = vmul.f32 %v488, %v159
    %v493 = vmul.f32 %v491, %v159
    %v494 = vsub.f32 %v484, %v492
    %v495 = vsub.f32 %v485, %v493
    %v496 = vmul.f32 %v494, %v494
    %v497 = vmul.f32 %v495, %v495
    %v498 = vsel %vm146, %v496, 0.0
    %499 = vadd.xlane.f32.xlu0 %v498
    %v500 = vpop.xlane.xlu0 %499
    %v501 = vsel %vm146, %v497, 0.0
    %502 = vadd.xlane.f32.xlu0 %v501
    %v503 = vpop.xlane.xlu0 %502
    %v504 = vmul.f32 %v500, %v159
    %v505 = vmul.f32 %v503, %v159
    %v506 = vadd.f32 %v504, 1e-05
    %v507 = vadd.f32 %v505, 1e-05
    %v508 = vrsqrt.pop %v506
    %v509 = vmul.f32 %v508, %v506
    %v510 = vmul.f32 %v509, %v508
    %v511 = vmul.f32 0.5, %v510
    %v512 = vsub.f32 1.5, %v511
    %v513 = vmul.f32 %v508, %v512
    %vm514 = vweird.f32 %v506
    %vm515 = vweird.f32 %v508
    %vm516 = vmor %vm514, %vm515
    %v517 = vsel %vm516, %v508, %v513
    %v518 = vrsqrt.pop %v507
    %v519 = vmul.f32 %v518, %v507
    %v520 = vmul.f32 %v519, %v518
    %v521 = vmul.f32 0.5, %v520
    %v522 = vsub.f32 1.5, %v521
    %v523 = vmul.f32 %v518, %v522
    %vm524 = vweird.f32 %v507
    %vm525 = vweird.f32 %v518
    %vm526 = vmor %vm524, %vm525
    %v527 = vsel %vm526, %v518, %v523
    %v528 = vmul.f32 %v494, %v517
    %v529 = vmul.f32 %v495, %v527
    %v530 = vperm.slane %v97, 4
    %v531 = vmul.f32 %v528, %v530
    %v532 = vmul.f32 %v529, %v530
    %534 = vrot.lane.b32.xlu0 %v530, 96
    %v535 = vpop.permute.xlu0 %534
    %v537 = vadd.f32 %v531, %v535
    %v538 = vadd.f32 %v532, %v535
    %v539 = vld [vmem:[#allocation2] sm:$0xff]
    %v540 = vld [vmem:[#allocation2 + $0x8] sm:$0xff]
    %v541 = vld [vmem:[#allocation2 + $0x10] sm:$0xff]
    %v542 = vld [vmem:[#allocation2 + $0x18] sm:$0xff]
    %v543 = vperm.slane %v97, 5
    %v545 = vsel %vm146, %v537, 0
    %v548 = vsel %vm146, %v538, 0
    %550 = vmatpush.msra.mxu0 0.0
    %551 = vmatpush.msra.mxu0 0.0
    %552 = vmatpush.msra.mxu0 0.0
    %553 = vmatpush.msra.mxu0 0.0
    %554 = vmatpush.msra.mxu0 0.0
    %555 = vmatpush.msra.mxu0 0.0
    %556 = vmatpush.msra.mxu0 0.0
    %557 = vmatpush.msra.mxu0 0.0
    %558 = vmatpush.msra.mxu0 0.0
    %559 = vmatpush.msra.mxu0 0.0
    %560 = vmatpush.msra.mxu0 0.0
    %561 = vmatpush.msra.mxu0 0.0
    %562 = vmatpush.msra.mxu0 %v542
    %563 = vmatpush.msra.mxu0 %v541
    %564 = vmatpush.msra.mxu0 %v540
    %565 = vmatpush.msra.mxu0 %v539
    %566 = vmatmul.f32.gmra.mxu0 %v545
    %v567 = vpop.f32.mrf.mxu0
    %v568 = vadd.f32 %v543, %v567
    %569 = vmatmul.f32.gmra.mxu0 %v548
    %v570 = vpop.f32.mrf.mxu0
    %v571 = vadd.f32 %v543, %v570
    %572 = vdwg.mxu0
    %573 = vst [vmem:[%s7] sm:$0xff] %v568
    %574 = vst [vmem:[%s7 + $0x8] sm:$0xff] %v571
    // Predicated region
    $region34: #{enhanced_tfn_forward.1} parent=1 // pred_check
      _
    $region35: #{enhanced_tfn_forward.1} parent=1 // pred_check_branch
      %576 = sbr.rel (0) target = $region37
    $region36: #{enhanced_tfn_forward.1} parent=1 // pred_region
      _
    $region37: #{enhanced_tfn_forward.1} parent=1 // pred_fallthru
      _
    // Predicated region
    $region38: #{enhanced_tfn_forward.1} parent=1 // pred_check
      _
    $region39: #{enhanced_tfn_forward.1} parent=1 // pred_check_branch
      %578 = sbr.rel (0) target = $region41
    $region40: #{enhanced_tfn_forward.1} parent=1 // pred_region
      _
    $region41: #{enhanced_tfn_forward.1} parent=1 // pred_fallthru
      _
    %579 = vsyncpa [#allocation3], 1

</llo_original>
